<compile_context>
chip_gen: v7x
topology: tpu7x:2x2x1
jax: 0.10.0
libtpu: 0.0.40
codegen_flags: <defaults>
</compile_context>

<pallas_src>
import functools

import jax
import jax.numpy as jnp
from jax.experimental import pallas as pl
from jax.experimental.pallas import tpu as pltpu

_C1 = 0.7978845608028654      # sqrt(2/pi)
_C2 = 0.035677408136300125    # 0.044715 * sqrt(2/pi)


def _gelu_kernel(x_ref, o_ref, *, compute_dtype):
    # HBM-bandwidth-bound streaming kernel; the polynomial + tanh are filler on
    # v5e/v6e and kept short enough to stay mem-bound on v7x.
    x = x_ref[...].astype(compute_dtype)
    inner = x * (_C1 + _C2 * (x * x))
    y = x * (0.5 + 0.5 * jnp.tanh(inner))
    o_ref[...] = y.astype(o_ref.dtype)


def _round_down(v, m):
    return (v // m) * m


def _compute_dtype_for(dtype):
    """bf16-native math on chips with bf16 VPU/EUP (v6e/v7x); f32 otherwise."""
    if jnp.dtype(dtype) != jnp.dtype(jnp.bfloat16):
        return jnp.float32
    try:
        kind = jax.devices()[0].device_kind.lower()
    except Exception:
        kind = ""
    if "v5" in kind or "v4" in kind or "v3" in kind:
        return jnp.float32  # no bf16 VPU/EUP on these generations
    return jnp.bfloat16


def gelu(x, *, target_block_bytes=4 * 1024 * 1024):
    """Elementwise tanh-GELU via Pallas; lane-dense layout, per-gen VMEM budget."""
    orig_shape = x.shape
    if x.size == 0:
        return x

    itemsize = jnp.dtype(x.dtype).itemsize
    sub = 8 * max(1, 4 // itemsize)          # sublane multiple: 8 f32, 16 bf16
    total = x.size
    hidden = orig_shape[-1] if x.ndim else 1

    # --- choose a lane-dense 2D view (reshape only; tail-pad as last resort) ---
    padded = False
    if hidden % 128 == 0:
        lane = hidden
        rows = total // lane
        x2d = x.reshape(rows, lane)
    elif total % 128 == 0:
        lane = 128                            # flatten and refold to 128 lanes
        rows = total // lane
        x2d = x.reshape(rows, lane)
    else:
        # Ragged: pad only the flattened tail up to the next multiple of 128 so
        # stores stay unmasked lane-dense vst (GELU(0) = 0, pad is harmless).
        pad = (-total) % 128
        flat = jnp.pad(x.reshape(total), (0, pad))
        lane = 128
        rows = (total + pad) // lane
        x2d = flat.reshape(rows, lane)
        padded = True

    # --- block sizing by bytes (~target_block_bytes per input block) ---
    max_lane = max(128, _round_down(target_block_bytes // (itemsize * sub), 128))
    block_lane = min(lane, max_lane)
    block_rows = min(
        rows,
        max(sub, _round_down(target_block_bytes // (block_lane * itemsize), sub)),
    )

    # --- v7x megacore: guarantee >= 2 steps on a parallel axis when possible ---
    n_row_blocks = pl.cdiv(rows, block_rows)
    n_lane_blocks = pl.cdiv(lane, block_lane)
    while n_row_blocks * n_lane_blocks < 2 and block_rows > sub:
        block_rows = max(sub, _round_down(block_rows // 2, sub))
        n_row_blocks = pl.cdiv(rows, block_rows)
    grid = (n_row_blocks, n_lane_blocks)

    # --- VMEM budget: in + out, double-buffered, with headroom; cap at 32 MiB
    #     so it fits v7x (64 MiB physical) as well as v5e/v6e scoped defaults.
    block_bytes = block_rows * block_lane * itemsize
    vmem_limit = int(min(32 << 20, max(8 << 20, 4 * block_bytes + (2 << 20))))

    compute_dtype = _compute_dtype_for(x.dtype)
    kernel = functools.partial(_gelu_kernel, compute_dtype=compute_dtype)

    cost = pl.CostEstimate(
        flops=6 * rows * lane,
        transcendentals=rows * lane,
        bytes_accessed=2 * rows * lane * itemsize,
    )

    out = pl.pallas_call(
        kernel,
        out_shape=jax.ShapeDtypeStruct((rows, lane), x.dtype),
        grid_spec=pltpu.PrefetchScalarGridSpec(
            num_scalar_prefetch=0,
            grid=grid,
            in_specs=[pl.BlockSpec((block_rows, block_lane), lambda i, j: (i, j))],
            out_specs=pl.BlockSpec((block_rows, block_lane), lambda i, j: (i, j)),
        ),
        compiler_params=pltpu.CompilerParams(
            dimension_semantics=("parallel", "parallel"),
            vmem_limit_bytes=vmem_limit,
        ),
        cost_estimate=cost,
    )(x2d)

    if padded:
        return out.reshape(-1)[:total].reshape(orig_shape)
    return out.reshape(orig_shape)


def gelu_ref(x):
    # Reference matches the PyTorch module exactly (tanh approximation).
    xf = x.astype(jnp.float32)
    c = jnp.sqrt(2.0 / jnp.pi)
    return (0.5 * xf * (1.0 + jnp.tanh(c * (xf + 0.044715 * xf**3)))).astype(x.dtype)


if __name__ == "__main__":
    key = jax.random.PRNGKey(0)

    # batch=2, seq=8, hidden=32 (matches the module's usage scale).
    x = jax.random.normal(key, (2, 8, 32), dtype=jnp.float32)
    y = gelu(x)
    jax.block_until_ready(y)
    y_ref = gelu_ref(x)
    assert y.shape == x.shape and y.dtype == x.dtype
    assert jnp.allclose(y, y_ref, atol=1e-5, rtol=1e-5)

    # bf16 path (native bf16 compute on v6e/v7x, f32 upcast on older chips).
    xb = jax.random.normal(jax.random.PRNGKey(1), (2, 8, 128), dtype=jnp.bfloat16)
    yb = gelu(xb)
    jax.block_until_ready(yb)
    yb_ref = gelu_ref(xb)
    assert yb.shape == xb.shape and yb.dtype == xb.dtype
    assert jnp.allclose(
        yb.astype(jnp.float32), yb_ref.astype(jnp.float32), atol=2e-2, rtol=2e-2
    )

    # Ragged path (total not a multiple of 128 -> tail-pad + refold + slice).
    xr = jax.random.normal(jax.random.PRNGKey(2), (3, 5, 7), dtype=jnp.float32)
    yr = gelu(xr)
    jax.block_until_ready(yr)
    assert yr.shape == xr.shape
    assert jnp.allclose(yr, gelu_ref(xr), atol=1e-5, rtol=1e-5)

    # Multi-block path (exercises the >=2 parallel grid steps logic).
    xm = jax.random.normal(jax.random.PRNGKey(3), (4, 128, 512), dtype=jnp.float32)
    ym = gelu(xm)
    jax.block_until_ready(ym)
    assert jnp.allclose(ym, gelu_ref(xm), atol=1e-5, rtol=1e-5)

    print("KERNEL_OK")
</pallas_src>

<mosaic_0001>
module attributes {stable_mosaic.version = 11 : i64} {
  func.func @_gelu_kernel(%arg0: i32, %arg1: i32, %arg2: memref<4x128xf32, #tpu.memory_space<vmem>>, %arg3: memref<4x128xf32, #tpu.memory_space<vmem>>) attributes {dimension_semantics = [#tpu.dimension_semantics<parallel>, #tpu.dimension_semantics<parallel>], iteration_bounds = array<i64: 1, 1>, scalar_prefetch = 0 : i64, scratch_operands = 0 : i64, tpu.core_type = #tpu.core_type<tc>, window_params = [{transform_indices = @transform_0, window_bounds = array<i64: 4, 128>}, {transform_indices = @transform_1, window_bounds = array<i64: 4, 128>}]} {
    %c0 = arith.constant 0 : index
    %c0_0 = arith.constant 0 : index
    %0 = vector.load %arg2[%c0, %c0_0] : memref<4x128xf32, #tpu.memory_space<vmem>>, vector<4x128xf32>
    %1 = arith.mulf %0, %0 : vector<4x128xf32>
    %cst = arith.constant 0.0356774069 : f32
    %2 = vector.broadcast %cst : f32 to vector<4x128xf32>
    %3 = arith.mulf %2, %1 : vector<4x128xf32>
    %cst_1 = arith.constant 0.797884583 : f32
    %4 = vector.broadcast %cst_1 : f32 to vector<4x128xf32>
    %5 = arith.addf %4, %3 : vector<4x128xf32>
    %6 = arith.mulf %0, %5 : vector<4x128xf32>
    %7 = math.tanh %6 : vector<4x128xf32>
    %cst_2 = arith.constant 5.000000e-01 : f32
    %8 = vector.broadcast %cst_2 : f32 to vector<4x128xf32>
    %9 = arith.mulf %8, %7 : vector<4x128xf32>
    %cst_3 = arith.constant 5.000000e-01 : f32
    %10 = vector.broadcast %cst_3 : f32 to vector<4x128xf32>
    %11 = arith.addf %10, %9 : vector<4x128xf32>
    %12 = arith.mulf %0, %11 : vector<4x128xf32>
    %c0_4 = arith.constant 0 : index
    %c0_5 = arith.constant 0 : index
    %13 = vector.load %arg3[%c0_4, %c0_5] : memref<4x128xf32, #tpu.memory_space<vmem>>, vector<4x128xf32>
    tpu.vector_store %arg3[%c0_4, %c0_5], %12 {strides = array<i32>} : memref<4x128xf32, #tpu.memory_space<vmem>>, vector<4x128xf32>,
    return
  }
  func.func @transform_0(%arg0: i32, %arg1: i32) -> (i32, i32) {
    %c0_i32 = arith.constant 0 : i32
    return %arg0, %arg1 : i32, i32
  }
  func.func @transform_1(%arg0: i32, %arg1: i32) -> (i32, i32) {
    %c0_i32 = arith.constant 0 : i32
    return %arg0, %arg1 : i32, i32
  }
}

</mosaic_0001>

<llo_original>
// kernel: tpu_custom_call.1
$region0: #{tpu_custom_call.1}
  #allocation0 [shape = 'u32[]', space=smem, size = 0x4, offset = 0x4, fixed_abs, tag = 'smem constant byte address 0x4 - core index']
  #allocation1 [shape = 'u32[144,128]{1,0:T(1,128)}', space=vmem, size = 0x12000, scoped, tag = 'internal scratch']
  %s0 = inlined_call_operand.hbm [shape: f32[4,128], index: 0, kind: input, shape index: {}]
  %s1 = inlined_call_operand.hbm [shape: f32[4,128], index: 1, kind: output, shape index: {}]
  %s2 = sld [smem:[#allocation0]]
  $region18: #{tpu_custom_call.1} parent=0
    _
  %s4 = ssub.s32 1, %s2
  %s5 = scalar_select 0, %s4, %s2
  $region1: #{tpu_custom_call.1} parent=0
    #allocation2 [shape = 'u8[2048]{0}', space=vmem, size = 0x800, scoped, tag = 'input window, operand 0, single buffered']
    #allocation3 [shape = 's32[1]{0}', space=sflag, size = 0x4, scoped, tag = 'scoped memory for tpu_custom_call.1']
    #allocation4 [shape = 's32[1]{0}', space=sflag, size = 0x4, scoped, tag = 'scoped memory for tpu_custom_call.1']
    #allocation5 [shape = 'u8[2048]{0}', space=vmem, size = 0x800, scoped, tag = 'output window, operand 0, single buffered']
    %6 = vsyncpa [#allocation3], 0
    %7 = vsyncpa [#allocation4], 0
    // Predicated region
    $region2: #{tpu_custom_call.1} parent=1 // pred_check
      _
    $region3: #{tpu_custom_call.1} parent=1 // pred_check_branch
      %9 = sbr.rel (0) target = $region5
    $region4: #{tpu_custom_call.1} parent=1 // pred_region
      %s11 = ssub.s32 64, 64
      %12 = vsyncadd [#allocation3], %s11
      %s14 = sshll.u32 [#allocation2], 4
      %s15 = int_to_ptr.vmem [resolvable:$true] %s14
      %17 = dma.hbm_to_vmem [thread:$0]  %s0, 64, %s15, [#allocation3]
    $region5: #{tpu_custom_call.1} parent=1 // pred_fallthru
      _
    // Predicated region
    $region6: #{tpu_custom_call.1} parent=1 // pred_check
      _
    $region7: #{tpu_custom_call.1} parent=1 // pred_check_branch
      %19 = sbr.rel (0) target = $region9
    $region8: #{tpu_custom_call.1} parent=1 // pred_region
      %20 = dma.done [#allocation3], 64
    $region9: #{tpu_custom_call.1} parent=1 // pred_fallthru
      _
    %v21 = vld [vmem:[#allocation2] sm:$0xf]
    %v22 = vmul.f32 %v21, %v21
    %v23 = vmul.f32 %v22, 0.035677407
    %v24 = vadd.f32 %v23, 0.7978846
    %v25 = vmul.f32 %v21, %v24
    %v26 = vtanh.pop %v25
    %v27 = vmul.f32 %v26, 0.5
    %v28 = vadd.f32 %v27, 0.5
    %v29 = vmul.f32 %v21, %v28
    %30 = vst [vmem:[#allocation5] sm:$0xf] %v29
    // Predicated region
    $region10: #{tpu_custom_call.1} parent=1 // pred_check
      _
    $region11: #{tpu_custom_call.1} parent=1 // pred_check_branch
      %32 = sbr.rel (0) target = $region13
    $region12: #{tpu_custom_call.1} parent=1 // pred_region
      %s34 = ssub.s32 64, 64
      %35 = vsyncadd [#allocation4], %s34
      %s37 = sshll.u32 [#allocation5], 4
      %s38 = int_to_ptr.vmem [resolvable:$true] %s37
      %40 = dma.vmem_to_hbm [thread:$0]  %s38, 64, %s1, [#allocation4]
    $region13: #{tpu_custom_call.1} parent=1 // pred_fallthru
      _
    // Predicated region
    $region14: #{tpu_custom_call.1} parent=1 // pred_check
      _
    $region15: #{tpu_custom_call.1} parent=1 // pred_check_branch
      %42 = sbr.rel (0) target = $region17
    $region16: #{tpu_custom_call.1} parent=1 // pred_region
      %43 = dma.done [#allocation4], 64
    $region17: #{tpu_custom_call.1} parent=1 // pred_fallthru
      _
    %44 = vsyncpa [#allocation3], 1
    %45 = vsyncpa [#allocation4], 1

</llo_original>
